<compile_context>
chip_gen: v7x
topology: tpu7x:2x2x1
jax: 0.10.0
libtpu: 0.0.40
codegen_flags: <defaults>
</compile_context>

<pallas_src>
import functools

import jax
import jax.numpy as jnp
from jax.experimental import pallas as pl
from jax.experimental.pallas import tpu as pltpu


def _round_up(x, m):
    return (x + m - 1) // m * m


def _tpu_vmem_capacity_bytes():
    """Physical VMEM per TensorCore; conservative 64 MiB (v7x) fallback."""
    try:
        info = pltpu.get_tpu_info()
        for name in ("vmem_capacity_bytes", "vmem_size_bytes", "vmem_bytes"):
            cap = getattr(info, name, None)
            if cap:
                return int(cap)
    except Exception:
        pass
    return 64 * 1024 * 1024


# --------------------------------------------------------------------------- #
# Kernels
# --------------------------------------------------------------------------- #
def _logits_lse_kernel(x_ref, w_ref, b_ref, z_ref, lse_ref, m_sc, l_sc):
    """Grid = (row_tiles, vocab_tiles).

    Per step: (tm, tv) = (tm, D) @ (D, tv) on the MXU (bf16 in, f32 acc),
    bias add, online logsumexp update (running max m_sc / running sum l_sc),
    and the *raw* logits are written straight to the output block so the HBM
    writeback overlaps the next tile's matmul.  On the last vocab tile the
    per-row logsumexp is emitted once.
    """
    j = pl.program_id(1)

    @pl.when(j == 0)
    def _init():
        m_sc[...] = jnp.full_like(m_sc, -jnp.inf)
        l_sc[...] = jnp.zeros_like(l_sc)

    z = jnp.dot(x_ref[...], w_ref[...], preferred_element_type=jnp.float32)
    z = z + b_ref[...]                      # bias add in f32

    # Online logsumexp update (numerically stable).
    m_prev = m_sc[...]
    m_new = jnp.maximum(m_prev, jnp.max(z, axis=-1, keepdims=True))
    l_sc[...] = (l_sc[...] * jnp.exp(m_prev - m_new)
                 + jnp.sum(jnp.exp(z - m_new), axis=-1, keepdims=True))
    m_sc[...] = m_new

    z_ref[...] = z                          # raw logits -> HBM (overlapped)

    @pl.when(j == pl.num_programs(1) - 1)
    def _emit_lse():
        lse_ref[...] = m_sc[...] + jnp.log(l_sc[...])


def _normalize_kernel(z_ref, lse_ref, o_ref):
    """Elementwise: log_prob = raw_logit - logsumexp(row).  Runs in place."""
    o_ref[...] = (z_ref[...] - lse_ref[...]).astype(o_ref.dtype)


# --------------------------------------------------------------------------- #
# Tiling / parameter preparation
# --------------------------------------------------------------------------- #
def _choose_tiles(M, D, V, *, compute_dtype, tm=None, tv=None):
    cap = _tpu_vmem_capacity_bytes()
    big_vmem = cap >= 100 * 1024 * 1024        # v5e / v6e: 128 MiB physical
    budget = int(cap * 0.65)                   # VMEM we allow our blocks to use
    vmem_limit = int(cap * 0.80)               # scoped-VMEM limit for Mosaic

    in_size = jnp.dtype(compute_dtype).itemsize

    # Vocab tile: big + lane-dense.  1024 on 128 MiB parts, 512 on 64 MiB parts.
    if tv is None:
        tv = 1024 if big_vmem else 512
    tv = max(128, _round_up(tv, 128))
    tv = min(tv, _round_up(V, 128))
    V_pad = _round_up(V, tv)

    # Row tile: as large as the budget allows (weight-reuse roofline: arithmetic
    # intensity of the streamed weight is ~tm flops/byte).
    tm_target = tm if tm is not None else (1024 if big_vmem else 512)
    tm = min(tm_target, _round_up(M, 8))

    # On small-VMEM (2-TensorCore) parts, guarantee >= 2 row tiles so the
    # "parallel" row axis can actually megacore-shard.
    if not big_vmem and M > 8:
        tm = min(tm, max(8, _round_up((M + 1) // 2, 8)))

    # Analytic VMEM fit (covers both kernels, double-buffered blocks):
    #   kernel 1: x 2*tm*D*in, w 2*D*tv*in, bias 2*tv*4, z-out 2*tm*tv*4, lse+scratch ~32*tm
    #   kernel 2: z-in 2*tm*tv*4, out 2*tm*tv*4, lse 2*tm*4
    fixed = 2 * D * tv * in_size + 8 * tv
    per_row = 2 * D * in_size + 16 * tv + 32
    tm_fit = max(8, (budget - fixed) // per_row)
    tm = int(min(tm, tm_fit))

    # MXU-friendly rounding (no halving overshoot).
    if tm >= 256:
        tm = tm // 256 * 256
    elif tm >= 128:
        tm = tm // 128 * 128
    else:
        tm = max(8, tm // 8 * 8)

    M_pad = _round_up(M, tm)
    return tm, tv, M_pad, V_pad, vmem_limit


def prepare_generator_params(weight, bias, *, V_pad, compute_dtype=jnp.bfloat16):
    """One-time weight/bias prep: cast to the MXU input dtype, pad the vocab and
    pre-transpose the weight to (D, V_pad) so the kernel is a plain NN matmul.
    In production, cache the result of this function across calls."""
    V, D = weight.shape
    w_t = weight.T.astype(compute_dtype)                       # (D, V)
    b_row = bias.reshape(1, V).astype(jnp.float32)
    if V_pad != V:
        w_t = jnp.pad(w_t, ((0, 0), (0, V_pad - V)))
        # Padded vocab columns get a hugely negative bias so exp() underflows to
        # zero and they never affect the softmax denominator.
        b_row = jnp.pad(b_row, ((0, 0), (0, V_pad - V)), constant_values=-1e30)
    return w_t, b_row


# --------------------------------------------------------------------------- #
# pallas_call plumbing
# --------------------------------------------------------------------------- #
def _generator_pallas_calls(x2, w_t, b_row, *, tm, tv, vmem_limit, out_dtype):
    M_pad, D = x2.shape
    V_pad = w_t.shape[1]
    ni, nj = M_pad // tm, V_pad // tv
    in_size = jnp.dtype(x2.dtype).itemsize

    # ---- kernel 1: raw logits + per-row logsumexp --------------------------
    z, lse = pl.pallas_call(
        _logits_lse_kernel,
        out_shape=(jax.ShapeDtypeStruct((M_pad, V_pad), jnp.float32),
                   jax.ShapeDtypeStruct((M_pad, 1), jnp.float32)),
        grid_spec=pltpu.PrefetchScalarGridSpec(
            num_scalar_prefetch=0,
            grid=(ni, nj),
            in_specs=[
                pl.BlockSpec((tm, D), lambda i, j: (i, 0)),   # x rows (resident over j)
                pl.BlockSpec((D, tv), lambda i, j: (0, j)),   # streamed (D, tv) weight tile
                pl.BlockSpec((1, tv), lambda i, j: (0, j)),   # bias tile (f32)
            ],
            out_specs=[
                pl.BlockSpec((tm, tv), lambda i, j: (i, j)),  # raw logits (lane-dense)
                pl.BlockSpec((tm, 1), lambda i, j: (i, 0)),   # logsumexp per row
            ],
            scratch_shapes=[
                pltpu.VMEM((tm, 1), jnp.float32),             # running max
                pltpu.VMEM((tm, 1), jnp.float32),             # running sum of exp
            ],
        ),
        compiler_params=pltpu.CompilerParams(
            dimension_semantics=("parallel", "arbitrary"),
            vmem_limit_bytes=vmem_limit),
        cost_estimate=pl.CostEstimate(
            flops=2 * M_pad * D * V_pad,
            transcendentals=M_pad * V_pad,
            bytes_accessed=(M_pad * D * in_size
                            + ni * V_pad * D * in_size
                            + V_pad * 4
                            + M_pad * V_pad * 4 + M_pad * 4)),
    )(x2, w_t, b_row)

    # ---- kernel 2: in-place normalize (log_prob = logit - lse) -------------
    alias = {0: 0} if jnp.dtype(out_dtype) == jnp.dtype(jnp.float32) else {}
    out = pl.pallas_call(
        _normalize_kernel,
        out_shape=jax.ShapeDtypeStruct((M_pad, V_pad), out_dtype),
        grid_spec=pltpu.PrefetchScalarGridSpec(
            num_scalar_prefetch=0,
            grid=(ni, nj),
            in_specs=[
                pl.BlockSpec((tm, tv), lambda i, j: (i, j)),
                pl.BlockSpec((tm, 1), lambda i, j: (i, 0)),
            ],
            out_specs=pl.BlockSpec((tm, tv), lambda i, j: (i, j)),
        ),
        compiler_params=pltpu.CompilerParams(
            dimension_semantics=("parallel", "parallel"),
            vmem_limit_bytes=vmem_limit),
        input_output_aliases=alias,        # overwrite the raw-logit buffer in place
        cost_estimate=pl.CostEstimate(
            flops=M_pad * V_pad,
            transcendentals=0,
            bytes_accessed=2 * M_pad * V_pad * 4 + M_pad * 4),
    )(z, lse)
    return out


@functools.partial(jax.jit,
                   static_argnames=("V", "tm", "tv", "vmem_limit",
                                    "out_dtype", "compute_dtype"))
def _generator_forward_impl(x, w_t, b_row, *, V, tm, tv, vmem_limit,
                            out_dtype, compute_dtype):
    B, S, D = x.shape
    M = B * S
    M_pad = _round_up(M, tm)
    x2 = x.reshape(M, D).astype(compute_dtype)
    if M_pad != M:
        x2 = jnp.pad(x2, ((0, M_pad - M), (0, 0)))
    out = _generator_pallas_calls(x2, w_t, b_row, tm=tm, tv=tv,
                                  vmem_limit=vmem_limit, out_dtype=out_dtype)
    # TODO(synk): when V_pad > V this slice is an extra full-output copy; pad the
    # vocab once at model-build time (or pick tv | V) to make it a no-op.
    return out[:M, :V].reshape(B, S, V)


def generator_forward(x, weight, bias, *, tm=None, tv=None,
                      compute_dtype=jnp.bfloat16, out_dtype=jnp.float32):
    """log_softmax(x @ weight.T + bias, axis=-1) as fused Pallas TPU kernels.

    x:      (batch, seq, dim_model)
    weight: (vocab, dim_model)  -- PyTorch nn.Linear layout
    bias:   (vocab,)
    returns (batch, seq, vocab) log-probabilities (out_dtype, default float32).
    """
    B, S, D = x.shape
    V = weight.shape[0]
    M = B * S

    tm, tv, _, V_pad, vmem_limit = _choose_tiles(
        M, D, V, compute_dtype=compute_dtype, tm=tm, tv=tv)

    # TODO(synk): in production, call prepare_generator_params() once and cache
    # (w_t, b_row) across forward calls instead of re-preparing per call.
    w_t, b_row = prepare_generator_params(weight, bias, V_pad=V_pad,
                                          compute_dtype=compute_dtype)

    return _generator_forward_impl(x, w_t, b_row, V=V, tm=tm, tv=tv,
                                   vmem_limit=vmem_limit, out_dtype=out_dtype,
                                   compute_dtype=compute_dtype)


def generator_reference(x, weight, bias):
    z = jnp.einsum("bsd,vd->bsv", x, weight) + bias
    return jax.nn.log_softmax(z, axis=-1)


# --------------------------------------------------------------------------- #
if __name__ == "__main__":
    # Small shapes consistent with the module.  Chosen so rows need padding
    # (M = 14 -> 16) and the vocab needs padding (250 -> 256) and splits into
    # multiple vocab tiles when tv=128.
    batch, seq, dim_model, vocab = 2, 7, 32, 250

    key = jax.random.PRNGKey(0)
    kx, kw, kb = jax.random.split(key, 3)

    x = jax.random.normal(kx, (batch, seq, dim_model), dtype=jnp.float32)
    bound = 1.0 / (dim_model ** 0.5)  # mimic nn.Linear default init
    weight = jax.random.uniform(kw, (vocab, dim_model), minval=-bound,
                                maxval=bound, dtype=jnp.float32)
    bias = jax.random.uniform(kb, (vocab,), minval=-bound, maxval=bound,
                              dtype=jnp.float32)

    # Run 1: tiny tiles to exercise multiple row tiles, multiple vocab tiles,
    # the online logsumexp and the in-place normalize.  Run 2: auto tiles.
    out_small = jax.block_until_ready(generator_forward(x, weight, bias, tm=8, tv=128))
    out_default = jax.block_until_ready(generator_forward(x, weight, bias))

    # References: exact f32, and one matching the kernel's bf16-rounded operands.
    ref_f32 = generator_reference(x, weight, bias)
    xb = x.astype(jnp.bfloat16).astype(jnp.float32)
    wb = weight.astype(jnp.bfloat16).astype(jnp.float32)
    ref_bf16 = generator_reference(xb, wb, bias)

    for out in (out_small, out_default):
        assert out.shape == (batch, seq, vocab)
        assert jnp.all(jnp.isfinite(out)), "non-finite log-probs"
        assert jnp.allclose(out, ref_bf16, atol=5e-3, rtol=1e-3), \
            "mismatch vs bf16-matched reference"
        assert jnp.allclose(out, ref_f32, atol=5e-2, rtol=1e-2), \
            "mismatch vs f32 reference"

    print("KERNEL_OK")
</pallas_src>

<mosaic_0001>
module attributes {stable_mosaic.version = 11 : i64} {
  func.func @_logits_lse_kernel(%arg0: i32, %arg1: i32, %arg2: memref<8x32xbf16, #tpu.memory_space<vmem>>, %arg3: memref<32x128xbf16, #tpu.memory_space<vmem>>, %arg4: memref<1x128xf32, #tpu.memory_space<vmem>>, %arg5: memref<8x128xf32, #tpu.memory_space<vmem>>, %arg6: memref<8x1xf32, #tpu.memory_space<vmem>>, %arg7: memref<8x1xf32, #tpu.memory_space<vmem>>, %arg8: memref<8x1xf32, #tpu.memory_space<vmem>>) attributes {dimension_semantics = [#tpu.dimension_semantics<parallel>, #tpu.dimension_semantics<arbitrary>], iteration_bounds = array<i64: 2, 2>, scalar_prefetch = 0 : i64, scratch_operands = 2 : i64, tpu.core_type = #tpu.core_type<tc>, window_params = [{transform_indices = @transform_0, window_bounds = array<i64: 8, 32>}, {transform_indices = @transform_1, window_bounds = array<i64: 32, 128>}, {transform_indices = @transform_2, window_bounds = array<i64: 1, 128>}, {transform_indices = @transform_3, window_bounds = array<i64: 8, 128>}, {transform_indices = @transform_4, window_bounds = array<i64: 8, 1>}]} {
    %c0_i32 = arith.constant 0 : i32
    %0 = arith.cmpi eq, %arg1, %c0_i32 : i32
    %1 = arith.extui %0 : i1 to i32
    %c0_i32_0 = arith.constant 0 : i32
    %2 = arith.cmpi ne, %1, %c0_i32_0 : i32
    scf.if %2 {
      %cst_19 = arith.constant 0xFF800000 : f32
      %29 = vector.broadcast %cst_19 : f32 to vector<8x1xf32>
      %c0_20 = arith.constant 0 : index
      %c0_21 = arith.constant 0 : index
      %30 = vector.load %arg7[%c0_20, %c0_21] : memref<8x1xf32, #tpu.memory_space<vmem>>, vector<8x1xf32>
      tpu.vector_store %arg7[%c0_20, %c0_21], %29 {strides = array<i32>} : memref<8x1xf32, #tpu.memory_space<vmem>>, vector<8x1xf32>,
      %cst_22 = arith.constant 0.000000e+00 : f32
      %31 = vector.broadcast %cst_22 : f32 to vector<8x1xf32>
      %c0_23 = arith.constant 0 : index
      %c0_24 = arith.constant 0 : index
      %32 = vector.load %arg8[%c0_23, %c0_24] : memref<8x1xf32, #tpu.memory_space<vmem>>, vector<8x1xf32>
      tpu.vector_store %arg8[%c0_23, %c0_24], %31 {strides = array<i32>} : memref<8x1xf32, #tpu.memory_space<vmem>>, vector<8x1xf32>,
    } else {
    }
    %c0 = arith.constant 0 : index
    %c0_1 = arith.constant 0 : index
    %3 = vector.load %arg2[%c0, %c0_1] : memref<8x32xbf16, #tpu.memory_space<vmem>>, vector<8x32xbf16>
    %c0_2 = arith.constant 0 : index
    %c0_3 = arith.constant 0 : index
    %4 = vector.load %arg3[%c0_2, %c0_3] : memref<32x128xbf16, #tpu.memory_space<vmem>>, vector<32x128xbf16>
    %cst = arith.constant dense<0.000000e+00> : vector<8x128xf32>
    %5 = tpu.matmul %3, %4, %cst {dimension_numbers = #tpu.dot_dimension_numbers<[1], [0], [0], [1], [0, 0, 1, 1], [], []>} : vector<8x32xbf16>, vector<32x128xbf16>, vector<8x128xf32> -> vector<8x128xf32>
    %c0_4 = arith.constant 0 : index
    %c0_5 = arith.constant 0 : index
    %6 = vector.load %arg4[%c0_4, %c0_5] : memref<1x128xf32, #tpu.memory_space<vmem>>, vector<1x128xf32>
    %7 = vector.broadcast %6 : vector<1x128xf32> to vector<8x128xf32>
    %8 = arith.addf %5, %7 : vector<8x128xf32>
    %c0_6 = arith.constant 0 : index
    %c0_7 = arith.constant 0 : index
    %9 = vector.load %arg7[%c0_6, %c0_7] : memref<8x1xf32, #tpu.memory_space<vmem>>, vector<8x1xf32>
    %cst_8 = arith.constant dense<0xFF800000> : vector<8xf32>
    %10 = vector.multi_reduction <maximumf>, %8, %cst_8 [1] : vector<8x128xf32> to vector<8xf32>
    %11 = vector.shape_cast %10 : vector<8xf32> to vector<8x1xf32>
    %12 = arith.maximumf %9, %11 : vector<8x1xf32>
    %c0_9 = arith.constant 0 : index
    %c0_10 = arith.constant 0 : index
    %13 = vector.load %arg8[%c0_9, %c0_10] : memref<8x1xf32, #tpu.memory_space<vmem>>, vector<8x1xf32>
    %14 = arith.subf %9, %12 : vector<8x1xf32>
    %15 = math.exp %14 : vector<8x1xf32>
    %16 = arith.mulf %13, %15 : vector<8x1xf32>
    %17 = vector.broadcast %12 : vector<8x1xf32> to vector<8x128xf32>
    %18 = arith.subf %8, %17 : vector<8x128xf32>
    %19 = math.exp %18 : vector<8x128xf32>
    %cst_11 = arith.constant dense<0.000000e+00> : vector<8xf32>
    %20 = vector.multi_reduction <add>, %19, %cst_11 [1] : vector<8x128xf32> to vector<8xf32>
    %21 = vector.shape_cast %20 : vector<8xf32> to vector<8x1xf32>
    %22 = arith.addf %16, %21 : vector<8x1xf32>
    %c0_12 = arith.constant 0 : index
    %c0_13 = arith.constant 0 : index
    %23 = vector.load %arg8[%c0_12, %c0_13] : memref<8x1xf32, #tpu.memory_space<vmem>>, vector<8x1xf32>
    tpu.vector_store %arg8[%c0_12, %c0_13], %22 {strides = array<i32>} : memref<8x1xf32, #tpu.memory_space<vmem>>, vector<8x1xf32>,
    %c0_14 = arith.constant 0 : index
    %c0_15 = arith.constant 0 : index
    %24 = vector.load %arg7[%c0_14, %c0_15] : memref<8x1xf32, #tpu.memory_space<vmem>>, vector<8x1xf32>
    tpu.vector_store %arg7[%c0_14, %c0_15], %12 {strides = array<i32>} : memref<8x1xf32, #tpu.memory_space<vmem>>, vector<8x1xf32>,
    %c0_16 = arith.constant 0 : index
    %c0_17 = arith.constant 0 : index
    %25 = vector.load %arg5[%c0_16, %c0_17] : memref<8x128xf32, #tpu.memory_space<vmem>>, vector<8x128xf32>
    tpu.vector_store %arg5[%c0_16, %c0_17], %8 {strides = array<i32>} : memref<8x128xf32, #tpu.memory_space<vmem>>, vector<8x128xf32>,
    %c1_i32 = arith.constant 1 : i32
    %26 = arith.cmpi eq, %arg1, %c1_i32 : i32
    %27 = arith.extui %26 : i1 to i32
    %c0_i32_18 = arith.constant 0 : i32
    %28 = arith.cmpi ne, %27, %c0_i32_18 : i32
    scf.if %28 {
      %c0_19 = arith.constant 0 : index
      %c0_20 = arith.constant 0 : index
      %29 = vector.load %arg7[%c0_19, %c0_20] : memref<8x1xf32, #tpu.memory_space<vmem>>, vector<8x1xf32>
      %c0_21 = arith.constant 0 : index
      %c0_22 = arith.constant 0 : index
      %30 = vector.load %arg8[%c0_21, %c0_22] : memref<8x1xf32, #tpu.memory_space<vmem>>, vector<8x1xf32>
      %31 = math.log %30 : vector<8x1xf32>
      %32 = arith.addf %29, %31 : vector<8x1xf32>
      %c0_23 = arith.constant 0 : index
      %c0_24 = arith.constant 0 : index
      %33 = vector.load %arg6[%c0_23, %c0_24] : memref<8x1xf32, #tpu.memory_space<vmem>>, vector<8x1xf32>
      tpu.vector_store %arg6[%c0_23, %c0_24], %32 {strides = array<i32>} : memref<8x1xf32, #tpu.memory_space<vmem>>, vector<8x1xf32>,
    } else {
    }
    return
  }
  func.func @transform_0(%arg0: i32, %arg1: i32) -> (i32, i32) {
    %c0_i32 = arith.constant 0 : i32
    %c0_i32_0 = arith.constant 0 : i32
    return %arg0, %c0_i32 : i32, i32
  }
  func.func @transform_1(%arg0: i32, %arg1: i32) -> (i32, i32) {
    %c0_i32 = arith.constant 0 : i32
    %c0_i32_0 = arith.constant 0 : i32
    return %c0_i32, %arg1 : i32, i32
  }
  func.func @transform_2(%arg0: i32, %arg1: i32) -> (i32, i32) {
    %c0_i32 = arith.constant 0 : i32
    %c0_i32_0 = arith.constant 0 : i32
    return %c0_i32, %arg1 : i32, i32
  }
  func.func @transform_3(%arg0: i32, %arg1: i32) -> (i32, i32) {
    %c0_i32 = arith.constant 0 : i32
    return %arg0, %arg1 : i32, i32
  }
  func.func @transform_4(%arg0: i32, %arg1: i32) -> (i32, i32) {
    %c0_i32 = arith.constant 0 : i32
    %c0_i32_0 = arith.constant 0 : i32
    return %arg0, %c0_i32 : i32, i32
  }
}

module attributes {stable_mosaic.version = 11 : i64} {
  func.func @_normalize_kernel(%arg0: i32, %arg1: i32, %arg2: memref<8x128xf32, #tpu.memory_space<vmem>>, %arg3: memref<8x1xf32, #tpu.memory_space<vmem>>, %arg4: memref<8x128xf32, #tpu.memory_space<vmem>>) attributes {dimension_semantics = [#tpu.dimension_semantics<parallel>, #tpu.dimension_semantics<parallel>], iteration_bounds = array<i64: 2, 2>, scalar_prefetch = 0 : i64, scratch_operands = 0 : i64, tpu.core_type = #tpu.core_type<tc>, window_params = [{transform_indices = @transform_0, window_bounds = array<i64: 8, 128>}, {transform_indices = @transform_1, window_bounds = array<i64: 8, 1>}, {transform_indices = @transform_2, window_bounds = array<i64: 8, 128>}]} {
    %c0 = arith.constant 0 : index
    %c0_0 = arith.constant 0 : index
    %0 = vector.load %arg2[%c0, %c0_0] : memref<8x128xf32, #tpu.memory_space<vmem>>, vector<8x128xf32>
    %c0_1 = arith.constant 0 : index
    %c0_2 = arith.constant 0 : index
    %1 = vector.load %arg3[%c0_1, %c0_2] : memref<8x1xf32, #tpu.memory_space<vmem>>, vector<8x1xf32>
    %2 = vector.broadcast %1 : vector<8x1xf32> to vector<8x128xf32>
    %3 = arith.subf %0, %2 : vector<8x128xf32>
    %c0_3 = arith.constant 0 : index
    %c0_4 = arith.constant 0 : index
    %4 = vector.load %arg4[%c0_3, %c0_4] : memref<8x128xf32, #tpu.memory_space<vmem>>, vector<8x128xf32>
    tpu.vector_store %arg4[%c0_3, %c0_4], %3 {strides = array<i32>} : memref<8x128xf32, #tpu.memory_space<vmem>>, vector<8x128xf32>,
    return
  }
  func.func @transform_0(%arg0: i32, %arg1: i32) -> (i32, i32) {
    %c0_i32 = arith.constant 0 : i32
    return %arg0, %arg1 : i32, i32
  }
  func.func @transform_1(%arg0: i32, %arg1: i32) -> (i32, i32) {
    %c0_i32 = arith.constant 0 : i32
    %c0_i32_0 = arith.constant 0 : i32
    return %arg0, %c0_i32 : i32, i32
  }
  func.func @transform_2(%arg0: i32, %arg1: i32) -> (i32, i32) {
    %c0_i32 = arith.constant 0 : i32
    return %arg0, %arg1 : i32, i32
  }
}

</mosaic_0001>

<llo_original>
// kernel: _generator_forward_impl.3
$region0: #{_generator_forward_impl.3}
  #allocation0 [shape = 'u32[]', space=smem, size = 0x4, offset = 0x4, fixed_abs, tag = 'smem constant byte address 0x4 - core index']
  #allocation1 [shape = 'u32[144,128]{1,0:T(1,128)}', space=vmem, size = 0x12000, scoped, tag = 'internal scratch']
  %s0 = inlined_call_operand.vmem [shape: f32[16,256], index: 0, kind: input, shape index: {}, may-alias: {0,2}]
  %s1 = inlined_call_operand.vmem [shape: f32[16,1], index: 1, kind: input, shape index: {}]
  %s2 = inlined_call_operand.vmem [shape: f32[16,256], index: 2, kind: output, shape index: {}, may-alias: {0,2}]
  %s3 = sld [smem:[#allocation0]]
  $region41: #{_generator_forward_impl.3} parent=0
    _
  %s5 = ssub.s32 1, %s3
  %s6 = scalar_select 0, %s5, %s3
  loop: start=0, step=1, limit=6
  $region2: #{_generator_forward_impl.3} parent=0 // loop_pre_header
    _
  $region3: #{_generator_forward_impl.3} parent=0 // loop_header
    %s8 = sphi 0, %s12
    %p9 = scmp.ge.s32.totalorder %s8, 6
    %s15 = sphi 0, %s27
    %s16 = sphi 0, %s23
    %s17 = sphi 0, %s15
    %s18 = sphi 0, %s16
    %s19 = sphi 0, %s17
    %s20 = sphi 0, %s18
    %s32 = sphi 0, %s34
    %s35 = sphi 0, %s32
    %s36 = sphi 0, %s35
    %s52 = sphi 0, %s36
    %s58 = sphi 0, %s60
    %s61 = sphi 0, %s58
    %s62 = sphi 0, %s61
    %s78 = sphi 0, %s62
    %s86 = sphi 0, %s88
    %s89 = sphi 0, %s86
    %s90 = sphi 0, %s89
    %s106 = sphi 0, %s90
  $region4: #{_generator_forward_impl.3} parent=0 // loop_header_branch
    %11 = sbr.rel (%p9) target = $region8
  $region5: #{_generator_forward_impl.3} parent=0 // loop_body
    %s13 = ssub.s32 %s8, 1
    %s14 = ssub.s32 %s8, 2
    %s21 = sadd.s32 1, %s16
    %p22 = scmp.ge.s32.totalorder %s21, 2
    %s23 = scalar_select %p22, 0, %s21
    %s24 = sadd.s32 1, %s15
    %s25 = scalar_select %p22, %s24, %s15
    %p26 = scmp.ge.s32.totalorder %s25, 2
    %s27 = scalar_select %p26, 0, %s25
    %s28 = ssub.s32 %s15, %s27
    %s29 = ssub.s32 %s16, %s23
    %s30 = sor.u32 %s28, %s29
    %p31 = scmp.eq.s32.totalorder %s30, 0
    %s33 = sadd.s32 %s32, 1
    %s34 = scalar_select %p31, %s32, %s33
    %p37 = pneg %p31
    %p38 = scmp.eq.s32.totalorder %s8, 3
    %p39 = por %p37, %p38
    %p40 = scmp.ne.s32.totalorder %s32, %s35
    %p41 = scmp.eq.s32.totalorder %s8, 0
    %p42 = por %p40, %p41
    %p43 = scmp.ne.s32.totalorder %s32, %s35
    %p44 = scmp.eq.s32.totalorder %s13, 3
    %p45 = por %p43, %p44
    %p46 = scmp.ne.s32.totalorder %s35, %s36
    %p47 = scmp.eq.s32.totalorder %s13, 0
    %p48 = por %p46, %p47
    %p49 = scmp.ne.s32.totalorder %s35, %s36
    %p50 = scmp.eq.s32.totalorder %s14, 3
    %p51 = por %p49, %p50
    %p53 = scmp.ne.s32.totalorder %s36, %s52
    %p54 = scmp.eq.s32.totalorder %s14, 0
    %p55 = por %p53, %p54
    %s56 = ssub.s32 %s15, %s27
    %p57 = scmp.eq.s32.totalorder %s56, 0
    %s59 = sadd.s32 %s58, 1
    %s60 = scalar_select %p57, %s58, %s59
    %p63 = pneg %p57
    %p64 = scmp.eq.s32.totalorder %s8, 3
    %p65 = por %p63, %p64
    %p66 = scmp.ne.s32.totalorder %s58, %s61
    %p67 = scmp.eq.s32.totalorder %s8, 0
    %p68 = por %p66, %p67
    %p69 = scmp.ne.s32.totalorder %s58, %s61
    %p70 = scmp.eq.s32.totalorder %s13, 3
    %p71 = por %p69, %p70
    %p72 = scmp.ne.s32.totalorder %s61, %s62
    %p73 = scmp.eq.s32.totalorder %s13, 0
    %p74 = por %p72, %p73
    %p75 = scmp.ne.s32.totalorder %s61, %s62
    %p76 = scmp.eq.s32.totalorder %s14, 3
    %p77 = por %p75, %p76
    %p79 = scmp.ne.s32.totalorder %s62, %s78
    %p80 = scmp.eq.s32.totalorder %s14, 0
    %p81 = por %p79, %p80
    %s82 = ssub.s32 %s15, %s27
    %s83 = ssub.s32 %s16, %s23
    %s84 = sor.u32 %s82, %s83
    %p85 = scmp.eq.s32.totalorder %s84, 0
    %s87 = sadd.s32 %s86, 1
    %s88 = scalar_select %p85, %s86, %s87
    %p91 = pneg %p85
    %p92 = scmp.eq.s32.totalorder %s8, 3
    %p93 = por %p91, %p92
    %p94 = scmp.ne.s32.totalorder %s86, %s89
    %p95 = scmp.eq.s32.totalorder %s8, 0
    %p96 = por %p94, %p95
    %p97 = scmp.ne.s32.totalorder %s86, %s89
    %p98 = scmp.eq.s32.totalorder %s13, 3
    %p99 = por %p97, %p98
    %p100 = scmp.ne.s32.totalorder %s89, %s90
    %p101 = scmp.eq.s32.totalorder %s13, 0
    %p102 = por %p100, %p101
    %p103 = scmp.ne.s32.totalorder %s89, %s90
    %p104 = scmp.eq.s32.totalorder %s14, 3
    %p105 = por %p103, %p104
    %p107 = scmp.ne.s32.totalorder %s90, %s106
    %p108 = scmp.eq.s32.totalorder %s14, 0
    %p109 = por %p107, %p108
    %p110 = scmp.le.s32.totalorder 1, %s8
    %p111 = scmp.lt.s32.totalorder %s8, 5
    %p112 = pnand %p110, %p111
    %p113 = pneg %p112
    // Predicated region
    $region9: #{_generator_forward_impl.3} parent=5 // pred_check
      _
    $region10: #{_generator_forward_impl.3} parent=5 // pred_check_branch
      %115 = sbr.rel (%p112) target = $region12
    $region11: #{_generator_forward_impl.3} parent=5 // pred_region
      %s116 = ssub.s32 %s8, 1
    $region12: #{_generator_forward_impl.3} parent=5 // pred_fallthru
      _
    %p117 = scmp.lt.s32.totalorder %s8, 4
    // Predicated region
    $region13: #{_generator_forward_impl.3} parent=5 // pred_check
      %p118 = pneg %p117
    $region14: #{_generator_forward_impl.3} parent=5 // pred_check_branch
      %120 = sbr.rel (%p118) target = $region16
    $region15: #{_generator_forward_impl.3} parent=5 // pred_region
      // Predicated region
      $region17: #{_generator_forward_impl.3} parent=15 // pred_check
        %p121 = pneg %p42
      $region18: #{_generator_forward_impl.3} parent=15 // pred_check_branch
        %123 = sbr.rel (%p121) target = $region20
      $region19: #{_generator_forward_impl.3} parent=15 // pred_region
        %p124 = scmp.lt.s32.totalorder %s15, 1
        %s125 = scalar_select %p124, %s15, 1
        %p126 = scmp.lt.s32.totalorder %s16, 1
        %s127 = scalar_select %p126, %s16, 1
        %s128 = smul.addr %s125, 2
        %s129 = sadd.s32 %s127, %s128
        %s130 = smul.addr %s129, 8
        %s131 = scalar_lea.vmem %s0, %s130
      $region20: #{_generator_forward_impl.3} parent=15 // pred_fallthru
        _
      // Predicated region
      $region21: #{_generator_forward_impl.3} parent=15 // pred_check
        %p132 = pneg %p68
      $region22: #{_generator_forward_impl.3} parent=15 // pred_check_branch
        %134 = sbr.rel (%p132) target = $region24
      $region23: #{_generator_forward_impl.3} parent=15 // pred_region
        %p135 = scmp.lt.s32.totalorder %s15, 1
        %s136 = scalar_select %p135, %s15, 1
        %s137 = smul.addr %s136, 8
        %s138 = scalar_lea.vmem %s1, %s137
      $region24: #{_generator_forward_impl.3} parent=15 // pred_fallthru
        _
    $region16: #{_generator_forward_impl.3} parent=5 // pred_fallthru
      _
    %p139 = scmp.le.s32.totalorder 1, %s8
    %p140 = scmp.lt.s32.totalorder %s8, 5
    %p141 = pnand %p139, %p140
    %p142 = pneg %p141
    // Predicated region
    $region25: #{_generator_forward_impl.3} parent=5 // pred_check
      _
    $region26: #{_generator_forward_impl.3} parent=5 // pred_check_branch
      %144 = sbr.rel (%p141) target = $region28
    $region27: #{_generator_forward_impl.3} parent=5 // pred_region
      %s145 = ssub.s32 %s8, 1
      %p146 = scmp.lt.s32.totalorder %s17, 1
      %s147 = scalar_select %p146, %s17, 1
      %p148 = scmp.lt.s32.totalorder %s18, 1
      %s149 = scalar_select %p148, %s18, 1
      %s150 = smul.addr %s147, 2
      %s151 = sadd.s32 %s149, %s150
      %s152 = smul.addr %s151, 8
      %s153 = scalar_lea.vmem %s0, %s152
      %p154 = pneg %p48
      %p155 = pneg %p45
      %p156 = scmp.lt.s32.totalorder %s17, 1
      %s157 = scalar_select %p156, %s17, 1
      %s158 = smul.addr %s157, 8
      %s159 = scalar_lea.vmem %s1, %s158
      %p160 = pneg %p74
      %p161 = pneg %p71
      %p162 = pneg %p102
      %p163 = pneg %p99
      %p164 = scmp.lt.s32.totalorder %s17, 1
      %s165 = scalar_select %p164, %s17, 1
      %p166 = scmp.lt.s32.totalorder %s18, 1
      %s167 = scalar_select %p166, %s18, 1
      %s168 = smul.addr %s165, 2
      %s169 = sadd.s32 %s167, %s168
      %s170 = smul.addr %s169, 8
      %s171 = scalar_lea.vmem %s2, %s170
      %p172 = scmp.lt.s32.totalorder %s17, 1
      %s173 = scalar_select %p172, %s17, 1
      %p174 = scmp.lt.s32.totalorder %s18, 1
      %s175 = scalar_select %p174, %s18, 1
      %s176 = smul.addr %s173, 2
      %s177 = sadd.s32 %s175, %s176
      %s178 = smul.addr %s177, 8
      %s179 = scalar_lea.vmem %s0, %s178
      %p180 = scmp.lt.s32.totalorder %s17, 1
      %s181 = scalar_select %p180, %s17, 1
      %s182 = smul.addr %s181, 8
      %s183 = scalar_lea.vmem %s1, %s182
      %p184 = scmp.lt.s32.totalorder %s17, 1
      %s185 = scalar_select %p184, %s17, 1
      %p186 = scmp.lt.s32.totalorder %s18, 1
      %s187 = scalar_select %p186, %s18, 1
      %s188 = smul.addr %s185, 2
      %s189 = sadd.s32 %s187, %s188
      %s190 = smul.addr %s189, 8
      %s191 = scalar_lea.vmem %s2, %s190
      %v192 = vld [vmem:[%s179] sm:$0xff]
      %v193 = vld [vmem:[%s183] sm:$0xff]
      %195 = vset.pattern.permute.xlu0 0
      %196 = vperm.xlu0 %195, %v193
      %v197 = vpop.permute.xlu0 %196
      %v199 = vsub.f32 %v192, %v197
      %200 = vst [vmem:[%s191] sm:$0xff] %v199
      %p201 = scmp.lt.s32.totalorder %s17, 1
      %s202 = scalar_select %p201, %s17, 1
      %p203 = scmp.lt.s32.totalorder %s18, 1
      %s204 = scalar_select %p203, %s18, 1
      %s205 = smul.addr %s202, 2
      %s206 = sadd.s32 %s204, %s205
      %s207 = smul.addr %s206, 8
      %s208 = scalar_lea.vmem %s2, %s207
      // Predicated region
      $region29: #{_generator_forward_impl.3} parent=27 // pred_check
        %p209 = pneg %p99
      $region30: #{_generator_forward_impl.3} parent=27 // pred_check_branch
        %211 = sbr.rel (%p209) target = $region32
      $region31: #{_generator_forward_impl.3} parent=27 // pred_region
        _
      $region32: #{_generator_forward_impl.3} parent=27 // pred_fallthru
        _
    $region28: #{_generator_forward_impl.3} parent=5 // pred_fallthru
      _
    %p212 = scmp.le.s32.totalorder 2, %s8
    // Predicated region
    $region33: #{_generator_forward_impl.3} parent=5 // pred_check
      %p213 = pneg %p212
    $region34: #{_generator_forward_impl.3} parent=5 // pred_check_branch
      %215 = sbr.rel (%p213) target = $region36
    $region35: #{_generator_forward_impl.3} parent=5 // pred_region
      %s216 = ssub.s32 %s8, 2
      // Predicated region
      $region37: #{_generator_forward_impl.3} parent=35 // pred_check
        %p217 = pneg %p105
      $region38: #{_generator_forward_impl.3} parent=35 // pred_check_branch
        %219 = sbr.rel (%p217) target = $region40
      $region39: #{_generator_forward_impl.3} parent=35 // pred_region
        %p220 = scmp.lt.s32.totalorder %s19, 1
        %s221 = scalar_select %p220, %s19, 1
        %p222 = scmp.lt.s32.totalorder %s20, 1
        %s223 = scalar_select %p222, %s20, 1
        %s224 = smul.addr %s221, 2
        %s225 = sadd.s32 %s223, %s224
        %s226 = smul.addr %s225, 8
        %s227 = scalar_lea.vmem %s2, %s226
      $region40: #{_generator_forward_impl.3} parent=35 // pred_fallthru
        _
    $region36: #{_generator_forward_impl.3} parent=5 // pred_fallthru
      _
  $region6: #{_generator_forward_impl.3} parent=0 // loop_footer
    %s12 = sadd.s32 1, %s8
  $region7: #{_generator_forward_impl.3} parent=0 // loop_footer_branch
    %7 = sbr.rel target = $region3
  $region8: #{_generator_forward_impl.3} parent=0 // loop_exit
    _

// kernel: _generator_forward_impl.2
$region0: #{_generator_forward_impl.2}
  #allocation0 [shape = 'u32[]', space=smem, size = 0x4, offset = 0x4, fixed_abs, tag = 'smem constant byte address 0x4 - core index']
  #allocation1 [shape = 'u32[144,128]{1,0:T(1,128)}', space=vmem, size = 0x12000, scoped, tag = 'internal scratch']
  #allocation2 [shape = 'f32[8,1]{1,0:T(8,128)}', space=vmem, size = 0x1000, scoped, tag = 'scratch operand']
  #allocation3 [shape = 'f32[8,1]{1,0:T(8,128)}', space=vmem, size = 0x1000, scoped, tag = 'scratch operand']
  %s0 = inlined_call_operand.vmem [shape: bf16[16,32], index: 0, kind: input, shape index: {}]
  %s1 = inlined_call_operand.vmem [shape: bf16[32,256], index: 1, kind: input, shape index: {}]
  %s2 = inlined_call_operand.vmem [shape: f32[1,256], index: 2, kind: input, shape index: {}]
  %s3 = inlined_call_operand.vmem [shape: f32[16,256], index: 3, kind: output, shape index: {0}]
  %s4 = inlined_call_operand.vmem [shape: f32[16,1], index: 4, kind: output, shape index: {1}]
  %5 = xla_tuple %s3, %s4
  %s6 = sld [smem:[#allocation0]]
  $region102: #{_generator_forward_impl.2} parent=0
    _
  %s8 = ssub.s32 1, %s6
  %s9 = scalar_select 0, %s8, %s6
  $region1: #{_generator_forward_impl.2} parent=0
    #allocation4 [shape = 'u8[16384]{0}', space=vmem, size = 0x4000, scoped, tag = 'input window, operand 1']
    loop: start=0, step=1, limit=6
    $region2: #{_generator_forward_impl.2} parent=1 // loop_pre_header
      _
    $region3: #{_generator_forward_impl.2} parent=1 // loop_header
      %s11 = sphi 0, %s15
      %p12 = scmp.ge.s32.totalorder %s11, 6
      %s18 = sphi 0, %s30
      %s19 = sphi 0, %s26
      %s20 = sphi 0, %s18
      %s21 = sphi 0, %s19
      %s22 = sphi 0, %s20
      %s23 = sphi 0, %s21
      %s33 = sphi 0, %s35
      %s36 = sphi 0, %s33
      %s37 = sphi 0, %s36
      %s53 = sphi 0, %s37
      %s59 = sphi 0, %s61
      %s62 = sphi 0, %s59
      %s63 = sphi 0, %s62
      %s79 = sphi 0, %s63
      %s85 = sphi 0, %s87
      %s88 = sphi 0, %s85
      %s89 = sphi 0, %s88
      %s105 = sphi 0, %s89
      %s113 = sphi 0, %s115
      %s116 = sphi 0, %s113
      %s117 = sphi 0, %s116
      %s133 = sphi 0, %s117
      %s139 = sphi 0, %s141
      %s142 = sphi 0, %s139
      %s143 = sphi 0, %s142
      %s159 = sphi 0, %s143
    $region4: #{_generator_forward_impl.2} parent=1 // loop_header_branch
      %14 = sbr.rel (%p12) target = $region8
    $region5: #{_generator_forward_impl.2} parent=1 // loop_body
      %s16 = ssub.s32 %s11, 1
      %s17 = ssub.s32 %s11, 2
      %s24 = sadd.s32 1, %s19
      %p25 = scmp.ge.s32.totalorder %s24, 2
      %s26 = scalar_select %p25, 0, %s24
      %s27 = sadd.s32 1, %s18
      %s28 = scalar_select %p25, %s27, %s18
      %p29 = scmp.ge.s32.totalorder %s28, 2
      %s30 = scalar_select %p29, 0, %s28
      %s31 = ssub.s32 %s18, %s30
      %p32 = scmp.eq.s32.totalorder %s31, 0
      %s34 = sadd.s32 %s33, 1
      %s35 = scalar_select %p32, %s33, %s34
      %p38 = pneg %p32
      %p39 = scmp.eq.s32.totalorder %s11, 3
      %p40 = por %p38, %p39
      %p41 = scmp.ne.s32.totalorder %s33, %s36
      %p42 = scmp.eq.s32.totalorder %s11, 0
      %p43 = por %p41, %p42
      %p44 = scmp.ne.s32.totalorder %s33, %s36
      %p45 = scmp.eq.s32.totalorder %s16, 3
      %p46 = por %p44, %p45
      %p47 = scmp.ne.s32.totalorder %s36, %s37
      %p48 = scmp.eq.s32.totalorder %s16, 0
      %p49 = por %p47, %p48
      %p50 = scmp.ne.s32.totalorder %s36, %s37
      %p51 = scmp.eq.s32.totalorder %s17, 3
      %p52 = por %p50, %p51
      %p54 = scmp.ne.s32.totalorder %s37, %s53
      %p55 = scmp.eq.s32.totalorder %s17, 0
      %p56 = por %p54, %p55
      %s57 = ssub.s32 %s19, %s26
      %p58 = scmp.eq.s32.totalorder %s57, 0
      %s60 = sadd.s32 %s59, 1
      %s61 = scalar_select %p58, %s59, %s60
      %p64 = pneg %p58
      %p65 = scmp.eq.s32.totalorder %s11, 3
      %p66 = por %p64, %p65
      %p67 = scmp.ne.s32.totalorder %s59, %s62
      %p68 = scmp.eq.s32.totalorder %s11, 0
      %p69 = por %p67, %p68
      %p70 = scmp.ne.s32.totalorder %s59, %s62
      %p71 = scmp.eq.s32.totalorder %s16, 3
      %p72 = por %p70, %p71
      %p73 = scmp.ne.s32.totalorder %s62, %s63
      %p74 = scmp.eq.s32.totalorder %s16, 0
      %p75 = por %p73, %p74
      %p76 = scmp.ne.s32.totalorder %s62, %s63
      %p77 = scmp.eq.s32.totalorder %s17, 3
      %p78 = por %p76, %p77
      %p80 = scmp.ne.s32.totalorder %s63, %s79
      %p81 = scmp.eq.s32.totalorder %s17, 0
      %p82 = por %p80, %p81
      %s83 = ssub.s32 %s19, %s26
      %p84 = scmp.eq.s32.totalorder %s83, 0
      %s86 = sadd.s32 %s85, 1
      %s87 = scalar_select %p84, %s85, %s86
      %p90 = pneg %p84
      %p91 = scmp.eq.s32.totalorder %s11, 3
      %p92 = por %p90, %p91
      %p93 = scmp.ne.s32.totalorder %s85, %s88
      %p94 = scmp.eq.s32.totalorder %s11, 0
      %p95 = por %p93, %p94
      %p96 = scmp.ne.s32.totalorder %s85, %s88
      %p97 = scmp.eq.s32.totalorder %s16, 3
      %p98 = por %p96, %p97
      %p99 = scmp.ne.s32.totalorder %s88, %s89
      %p100 = scmp.eq.s32.totalorder %s16, 0
      %p101 = por %p99, %p100
      %p102 = scmp.ne.s32.totalorder %s88, %s89
      %p103 = scmp.eq.s32.totalorder %s17, 3
      %p104 = por %p102, %p103
      %p106 = scmp.ne.s32.totalorder %s89, %s105
      %p107 = scmp.eq.s32.totalorder %s17, 0
      %p108 = por %p106, %p107
      %s109 = ssub.s32 %s18, %s30
      %s110 = ssub.s32 %s19, %s26
      %s111 = sor.u32 %s109, %s110
      %p112 = scmp.eq.s32.totalorder %s111, 0
      %s114 = sadd.s32 %s113, 1
      %s115 = scalar_select %p112, %s113, %s114
      %p118 = pneg %p112
      %p119 = scmp.eq.s32.totalorder %s11, 3
      %p120 = por %p118, %p119
      %p121 = scmp.ne.s32.totalorder %s113, %s116
      %p122 = scmp.eq.s32.totalorder %s11, 0
      %p123 = por %p121, %p122
      %p124 = scmp.ne.s32.totalorder %s113, %s116
      %p125 = scmp.eq.s32.totalorder %s16, 3
      %p126 = por %p124, %p125
      %p127 = scmp.ne.s32.totalorder %s116, %s117
      %p128 = scmp.eq.s32.totalorder %s16, 0
      %p129 = por %p127, %p128
      %p130 = scmp.ne.s32.totalorder %s116, %s117
      %p131 = scmp.eq.s32.totalorder %s17, 3
      %p132 = por %p130, %p131
      %p134 = scmp.ne.s32.totalorder %s117, %s133
      %p135 = scmp.eq.s32.totalorder %s17, 0
      %p136 = por %p134, %p135
      %s137 = ssub.s32 %s18, %s30
      %p138 = scmp.eq.s32.totalorder %s137, 0
      %s140 = sadd.s32 %s139, 1
      %s141 = scalar_select %p138, %s139, %s140
      %p144 = pneg %p138
      %p145 = scmp.eq.s32.totalorder %s11, 3
      %p146 = por %p144, %p145
      %p147 = scmp.ne.s32.totalorder %s139, %s142
      %p148 = scmp.eq.s32.totalorder %s11, 0
      %p149 = por %p147, %p148
      %p150 = scmp.ne.s32.totalorder %s139, %s142
      %p151 = scmp.eq.s32.totalorder %s16, 3
      %p152 = por %p150, %p151
      %p153 = scmp.ne.s32.totalorder %s142, %s143
      %p154 = scmp.eq.s32.totalorder %s16, 0
      %p155 = por %p153, %p154
      %p156 = scmp.ne.s32.totalorder %s142, %s143
      %p157 = scmp.eq.s32.totalorder %s17, 3
      %p158 = por %p156, %p157
      %p160 = scmp.ne.s32.totalorder %s143, %s159
      %p161 = scmp.eq.s32.totalorder %s17, 0
      %p162 = por %p160, %p161
      %p163 = scmp.le.s32.totalorder 1, %s11
      %p164 = scmp.lt.s32.totalorder %s11, 5
      %p165 = pnand %p163, %p164
      %p166 = pneg %p165
      // Predicated region
      $region9: #{_generator_forward_impl.2} parent=5 // pred_check
        _
      $region10: #{_generator_forward_impl.2} parent=5 // pred_check_branch
        %168 = sbr.rel (%p165) target = $region12
      $region11: #{_generator_forward_impl.2} parent=5 // pred_region
        %s169 = ssub.s32 %s11, 1
      $region12: #{_generator_forward_impl.2} parent=5 // pred_fallthru
        _
      %p170 = scmp.lt.s32.totalorder %s11, 4
      // Predicated region
      $region13: #{_generator_forward_impl.2} parent=5 // pred_check
        %p171 = pneg %p170
      $region14: #{_generator_forward_impl.2} parent=5 // pred_check_branch
        %173 = sbr.rel (%p171) target = $region16
      $region15: #{_generator_forward_impl.2} parent=5 // pred_region
        // Predicated region
        $region17: #{_generator_forward_impl.2} parent=15 // pred_check
          %p174 = pneg %p43
        $region18: #{_generator_forward_impl.2} parent=15 // pred_check_branch
          %176 = sbr.rel (%p174) target = $region20
        $region19: #{_generator_forward_impl.2} parent=15 // pred_region
          %p177 = scmp.lt.s32.totalorder %s18, 1
          %s178 = scalar_select %p177, %s18, 1
          %s179 = smul.addr %s178, 4
          %s180 = scalar_lea.vmem %s0, %s179
        $region20: #{_generator_forward_impl.2} parent=15 // pred_fallthru
          _
        // Predicated region
        $region21: #{_generator_forward_impl.2} parent=15 // pred_check
          %p181 = pneg %p69
        $region22: #{_generator_forward_impl.2} parent=15 // pred_check_branch
          %183 = sbr.rel (%p181) target = $region24
        $region23: #{_generator_forward_impl.2} parent=15 // pred_region
          %s184 = sand.u32 %s59, 1
          %s185 = sand.u32 %s59, 1
          %s186 = smul.addr %s185, 16
          %s187 = scalar_lea.vmem [#allocation4], %s186
          %s188 = smul.addr %s19, 4
          %s189 = scalar_lea.vmem %s1, %s188
          // Predicated region
          $region25: #{_generator_forward_impl.2} parent=23 // pred_check
            _
          $region26: #{_generator_forward_impl.2} parent=23 // pred_check_branch
            %191 = sbr.rel (0) target = $region28
          $region27: #{_generator_forward_impl.2} parent=23 // pred_region
            // Predicated region
            $region29: #{_generator_forward_impl.2} parent=27 // pred_check
              _
            $region30: #{_generator_forward_impl.2} parent=27 // pred_check_branch
              %193 = sbr.rel target = $region32
            $region31: #{_generator_forward_impl.2} parent=27 // pred_region
              // Predicated region
              $region44: #{_generator_forward_impl.2} parent=31 // pred_check
                _
              $region45: #{_generator_forward_impl.2} parent=31 // pred_check_branch
                %214 = sbr.rel (0) target = $region47
              $region46: #{_generator_forward_impl.2} parent=31 // pred_region
                loop: start=0, step=1, limit=1
                $region48: #{_generator_forward_impl.2} parent=46 // loop_pre_header
                  _
                $region49: #{_generator_forward_impl.2} parent=46 // loop_header
                  %s216 = sphi 0, %s220
                  %p217 = scmp.ge.s32.totalorder %s216, 1
                  %s221 = sphi %s189, %s189
                  %s222 = sphi %s187, %s187
                $region50: #{_generator_forward_impl.2} parent=46 // loop_header_branch
                  %219 = sbr.rel (%p217) target = $region54
                $region51: #{_generator_forward_impl.2} parent=46 // loop_body
                  _
                $region52: #{_generator_forward_impl.2} parent=46 // loop_footer
                  %s220 = sadd.s32 1, %s216
                $region53: #{_generator_forward_impl.2} parent=46 // loop_footer_branch
                  %215 = sbr.rel target = $region49
                $region54: #{_generator_forward_impl.2} parent=46 // loop_exit
                  _
                loop: start=0, step=1, limit=1
                $region55: #{_generator_forward_impl.2} parent=46 // loop_pre_header
                  _
                $region56: #{_generator_forward_impl.2} parent=46 // loop_header
                  %s225 = sphi 0, %s229
                  %p226 = scmp.ge.s32.totalorder %s225, 1
                  %s230 = sphi %s189, %s189
                  %s231 = sphi %s187, %s187
                $region57: #{_generator_forward_impl.2} parent=46 // loop_header_branch
                  %228 = sbr.rel (%p226) target = $region61
                $region58: #{_generator_forward_impl.2} parent=46 // loop_body
                  %v232 = vld [vmem:[%s230] sm:$0xf]
                  %233 = vst [vmem:[%s231] sm:$0xf] %v232
                  %v234 = vld [vmem:[%s230 + $0x8] sm:$0xf]
                  %235 = vst [vmem:[%s231 + $0x4] sm:$0xf] %v234
                  %v236 = vld [vmem:[%s230 + $0x10] sm:$0xf]
                  %237 = vst [vmem:[%s231 + $0x8] sm:$0xf] %v236
                  %v238 = vld [vmem:[%s230 + $0x18] sm:$0xf]
                  %239 = vst [vmem:[%s231 + $0xc] sm:$0xf] %v238
                $region59: #{_generator_forward_impl.2} parent=46 // loop_footer
                  %s229 = sadd.s32 1, %s225
                $region60: #{_generator_forward_impl.2} parent=46 // loop_footer_branch
                  %224 = sbr.rel target = $region56
                $region61: #{_generator_forward_impl.2} parent=46 // loop_exit
                  _
              $region47: #{_generator_forward_impl.2} parent=31 // pred_fallthru
                _
            $region32: #{_generator_forward_impl.2} parent=27 // pred_fallthru
              _
            // Predicated region
            $region33: #{_generator_forward_impl.2} parent=27 // pred_check
              _
            $region34: #{_generator_forward_impl.2} parent=27 // pred_check_branch
              %195 = sbr.rel (0) target = $region36
            $region35: #{_generator_forward_impl.2} parent=27 // pred_region
              loop: start=0, step=1, limit=1
              $region37: #{_generator_forward_impl.2} parent=35 // loop_pre_header
                _
              $region38: #{_generator_forward_impl.2} parent=35 // loop_header
                %s198 = sphi 0, %s202
                %p199 = scmp.ge.s32.totalorder %s198, 1
                %s203 = sphi %s189, %s189
                %s204 = sphi %s187, %s187
              $region39: #{_generator_forward_impl.2} parent=35 // loop_header_branch
                %201 = sbr.rel (%p199) target = $region43
              $region40: #{_generator_forward_impl.2} parent=35 // loop_body
                %v205 = vld [vmem:[%s203] sm:$0xf]
                %206 = vst [vmem:[%s204] sm:$0xf] %v205
                %v207 = vld [vmem:[%s203 + $0x8] sm:$0xf]
                %208 = vst [vmem:[%s204 + $0x4] sm:$0xf] %v207
                %v209 = vld [vmem:[%s203 + $0x10] sm:$0xf]
                %210 = vst [vmem:[%s204 + $0x8] sm:$0xf] %v209
                %v211 = vld [vmem:[%s203 + $0x18] sm:$0xf]
                %212 = vst [vmem:[%s204 + $0xc] sm:$0xf] %v211
              $region41: #{_generator_forward_impl.2} parent=35 // loop_footer
                %s202 = sadd.s32 1, %s198
              $region42: #{_generator_forward_impl.2} parent=35 // loop_footer_branch
                %197 = sbr.rel target = $region38
              $region43: #{_generator_forward_impl.2} parent=35 // loop_exit
                _
            $region36: #{_generator_forward_impl.2} parent=27 // pred_fallthru
              _
          $region28: #{_generator_forward_impl.2} parent=23 // pred_fallthru
            _
          %240 = vnop
        $region24: #{_generator_forward_impl.2} parent=15 // pred_fallthru
          _
        // Predicated region
        $region62: #{_generator_forward_impl.2} parent=15 // pred_check
          %p241 = pneg %p95
        $region63: #{_generator_forward_impl.2} parent=15 // pred_check_branch
          %243 = sbr.rel (%p241) target = $region65
        $region64: #{_generator_forward_impl.2} parent=15 // pred_region
          %p244 = scmp.lt.s32.totalorder %s19, 1
          %s245 = scalar_select %p244, %s19, 1
          %s246 = scalar_lea.vmem %s2, %s245
        $region65: #{_generator_forward_impl.2} parent=15 // pred_fallthru
          _
      $region16: #{_generator_forward_impl.2} parent=5 // pred_fallthru
        _
      %p247 = scmp.le.s32.totalorder 1, %s11
      %p248 = scmp.lt.s32.totalorder %s11, 5
      %p249 = pnand %p247, %p248
      %p250 = pneg %p249
      // Predicated region
      $region66: #{_generator_forward_impl.2} parent=5 // pred_check
        _
      $region67: #{_generator_forward_impl.2} parent=5 // pred_check_branch
        %252 = sbr.rel (%p249) target = $region69
      $region68: #{_generator_forward_impl.2} parent=5 // pred_region
        %s253 = ssub.s32 %s11, 1
        %s254 = sand.u32 %s62, 1
        %s255 = sand.u32 %s62, 1
        %s256 = smul.addr %s255, 16
        %s257 = scalar_lea.vmem [#allocation4], %s256
        // Predicated region
        $region70: #{_generator_forward_impl.2} parent=68 // pred_check
          %p258 = pneg %p75
        $region71: #{_generator_forward_impl.2} parent=68 // pred_check_branch
          %260 = sbr.rel (%p258) target = $region73
        $region72: #{_generator_forward_impl.2} parent=68 // pred_region
          _
        $region73: #{_generator_forward_impl.2} parent=68 // pred_fallthru
          _
        %p261 = scmp.lt.s32.totalorder %s20, 1
        %s262 = scalar_select %p261, %s20, 1
        %s263 = smul.addr %s262, 4
        %s264 = scalar_lea.vmem %s0, %s263
        %p265 = pneg %p49
        %p266 = pneg %p46
        %s267 = sand.u32 %s62, 1
        %s268 = sand.u32 %s62, 1
        %s269 = smul.addr %s268, 16
        %s270 = scalar_lea.vmem [#allocation4], %s269
        %p271 = pneg %p75
        %p272 = pneg %p72
        %p273 = scmp.lt.s32.totalorder %s21, 1
        %s274 = scalar_select %p273, %s21, 1
        %s275 = scalar_lea.vmem %s2, %s274
        %p276 = pneg %p101
        %p277 = pneg %p98
        %p278 = pneg %p129
        %p279 = pneg %p126
        %p280 = scmp.lt.s32.totalorder %s20, 1
        %s281 = scalar_select %p280, %s20, 1
        %p282 = scmp.lt.s32.totalorder %s21, 1
        %s283 = scalar_select %p282, %s21, 1
        %s284 = smul.addr %s281, 2
        %s285 = sadd.s32 %s283, %s284
        %s286 = smul.addr %s285, 8
        %s287 = scalar_lea.vmem %s3, %s286
        %p288 = pneg %p155
        %p289 = pneg %p152
        %p290 = scmp.lt.s32.totalorder %s20, 1
        %s291 = scalar_select %p290, %s20, 1
        %s292 = smul.addr %s291, 8
        %s293 = scalar_lea.vmem %s4, %s292
        %p294 = scmp.lt.s32.totalorder %s20, 1
        %s295 = scalar_select %p294, %s20, 1
        %s296 = smul.addr %s295, 4
        %s297 = scalar_lea.vmem %s0, %s296
        %p298 = scmp.lt.s32.totalorder %s21, 1
        %s299 = scalar_select %p298, %s21, 1
        %s300 = scalar_lea.vmem %s2, %s299
        %p301 = scmp.lt.s32.totalorder %s20, 1
        %s302 = scalar_select %p301, %s20, 1
        %p303 = scmp.lt.s32.totalorder %s21, 1
        %s304 = scalar_select %p303, %s21, 1
        %s305 = smul.addr %s302, 2
        %s306 = sadd.s32 %s304, %s305
        %s307 = smul.addr %s306, 8
        %s308 = scalar_lea.vmem %s3, %s307
        %p309 = scmp.lt.s32.totalorder %s20, 1
        %s310 = scalar_select %p309, %s20, 1
        %s311 = smul.addr %s310, 8
        %s312 = scalar_lea.vmem %s4, %s311
        %p314 = scmp.eq.s32.totalorder %s21, 0
        // Predicated region
        $region74: #{_generator_forward_impl.2} parent=68 // pred_check
          %p315 = pneg %p314
        $region75: #{_generator_forward_impl.2} parent=68 // pred_check_branch
          %317 = sbr.rel (%p315) target = $region77
        $region76: #{_generator_forward_impl.2} parent=68 // pred_region
          %vm318 = vcmask 7168
          %319 = vst.msk [vmem:[#allocation2] sm:$0xff] %vm318, -inf
          %320 = vst.msk [vmem:[#allocation3] sm:$0xff] %vm318, 0.0
        $region77: #{_generator_forward_impl.2} parent=68 // pred_fallthru
          _
        %v321 = vld [vmem:[%s297] sm:$0xf]
        %v322 = vld [vmem:[%s257] sm:$0xf]
        %v323 = vld [vmem:[%s257 + $0x4] sm:$0xf]
        %v324 = vld [vmem:[%s257 + $0x8] sm:$0xf]
        %v325 = vld [vmem:[%s257 + $0xc] sm:$0xf]
        %v326 = vld [vmem:[%s300] sm:$0x1]
        %v328 = vlaneseq
        %v329 = vshrl.u32 %v328, 7
        %v330 = vsub.s32 0, %v329
        %v331 = vrot.slane %v326, %v330
        %v337 = vunpack.c.l.b16 %v322
        %v338 = vunpack.c.l.b16 %v323
        %v339 = vunpack.c.l.b16 %v324
        %v340 = vunpack.c.l.b16 %v325
        %v341 = vpack.c.b16 %v338, %v337
        %v342 = vpack.c.b16 %v340, %v339
        %vm345 = vcmask 261120
        %v347 = vsel %vm345, %v321, 0
        %349 = vmatprep.subr.bf16.mxu0 0
        %350 = vmatpush1.bf16.msra.mxu0 %v341
        %351 = vmatprep.subr.bf16.mxu0 0
        %352 = vmatpush1.bf16.msra.mxu0 %v342
        %353 = vmatprep.subr.bf16.mxu0 0
        %354 = vmatpush1.bf16.msra.mxu0 0
        %355 = vmatprep.subr.bf16.mxu0 0
        %356 = vmatpush1.bf16.msra.mxu0 0
        %357 = vmatprep.subr.bf16.mxu0 0
        %358 = vmatpush1.bf16.msra.mxu0 0
        %359 = vmatprep.subr.bf16.mxu0 0
        %360 = vmatpush1.bf16.msra.mxu0 0
        %361 = vmatprep.subr.bf16.mxu0 0
        %362 = vmatpush1.bf16.msra.mxu0 0
        %363 = vmatprep.subr.bf16.mxu0 0
        %364 = vmatpush1.bf16.msra.mxu0 0
        %365 = vmatprep.subr.bf16.mxu0 0
        %366 = vmatpush1.bf16.msra.mxu0 0
        %367 = vmatprep.subr.bf16.mxu0 0
        %368 = vmatpush1.bf16.msra.mxu0 0
        %369 = vmatprep.subr.bf16.mxu0 0
        %370 = vmatpush1.bf16.msra.mxu0 0
        %371 = vmatprep.subr.bf16.mxu0 0
        %372 = vmatpush1.bf16.msra.mxu0 0
        %373 = vmatprep.subr.bf16.mxu0 0
        %374 = vmatpush1.bf16.msra.mxu0 0
        %375 = vmatprep.subr.bf16.mxu0 0
        %376 = vmatpush1.bf16.msra.mxu0 0
        %377 = vmatprep.subr.bf16.mxu0 0
        %378 = vmatpush1.bf16.msra.mxu0 0
        %379 = vmatprep.subr.bf16.mxu0 0
        %380 = vmatpush1.bf16.msra.mxu0 0
        %381 = vmatprep.mubr.bf16.mxu0 0
        %382 = vmatmul.mubr.bf16.gmra.mrb[0].mxu0 %v347
        %v383 = vpop.f32.mrb[0].mxu0
        %v384 = vadd.f32 %v331, %v383
        %v385 = vpop.f32.mrb[0].mxu0
        %v386 = vpop.f32.mrb[0].mxu0
        %v387 = vpop.f32.mrb[0].mxu0
        %388 = vdwg.mxu0
        %v389 = vld [vmem:[#allocation2] sm:$0xff]
        %390 = vmax.xlane.f32.xlu0 %v384
        %v391 = vpop.xlane.xlu0 %390
        %v392 = vmax.f32 %v389, %v391
        %v393 = vld [vmem:[#allocation3] sm:$0xff]
        %v394 = vsub.f32 %v389, %v392
        %v395 = vmul.f32 %v394, 1.442695
        %v396 = vpow.pop %v395
        %v397 = vmul.f32 %v393, %v396
        %399 = vset.pattern.permute.xlu0 0
        %400 = vperm.xlu0 %399, %v392
        %v401 = vpop.permute.xlu0 %400
        %v403 = vsub.f32 %v384, %v401
        %v404 = vmul.f32 %v403, 1.442695
        %v405 = vpow.pop %v404
        %406 = vadd.xlane.f32.xlu0 %v405
        %v407 = vpop.xlane.xlu0 %406
        %v408 = vadd.f32 %v397, %v407
        %vm409 = vcmask 7168
        %410 = vst.msk [vmem:[#allocation3] sm:$0xff] %vm409, %v408
        %411 = vst.msk [vmem:[#allocation2] sm:$0xff] %vm409, %v392
        %412 = vst [vmem:[%s308] sm:$0xff] %v384
        %p413 = scmp.eq.s32.totalorder %s21, 1
        // Predicated region
        $region78: #{_generator_forward_impl.2} parent=68 // pred_check
          %p414 = pneg %p413
        $region79: #{_generator_forward_impl.2} parent=68 // pred_check_branch
          %416 = sbr.rel (%p414) target = $region81
        $region80: #{_generator_forward_impl.2} parent=68 // pred_region
          %v417 = vld [vmem:[#allocation2] sm:$0xff]
          %v418 = vld [vmem:[#allocation3] sm:$0xff]
          %v419 = vlog2.pop %v418
          %v420 = vmul.f32 %v419, 0.6931472
          %v421 = vadd.f32 %v417, %v420
          %422 = vst.msk [vmem:[%s312] sm:$0xff] %vm409, %v421
        $region81: #{_generator_forward_impl.2} parent=68 // pred_fallthru
          _
        %p423 = scmp.lt.s32.totalorder %s20, 1
        %s424 = scalar_select %p423, %s20, 1
        %p425 = scmp.lt.s32.totalorder %s21, 1
        %s426 = scalar_select %p425, %s21, 1
        %s427 = smul.addr %s424, 2
        %s428 = sadd.s32 %s426, %s427
        %s429 = smul.addr %s428, 8
        %s430 = scalar_lea.vmem %s3, %s429
        %p431 = scmp.lt.s32.totalorder %s20, 1
        %s432 = scalar_select %p431, %s20, 1
        %s433 = smul.addr %s432, 8
        %s434 = scalar_lea.vmem %s4, %s433
        // Predicated region
        $region82: #{_generator_forward_impl.2} parent=68 // pred_check
          %p435 = pneg %p126
        $region83: #{_generator_forward_impl.2} parent=68 // pred_check_branch
          %437 = sbr.rel (%p435) target = $region85
        $region84: #{_generator_forward_impl.2} parent=68 // pred_region
          _
        $region85: #{_generator_forward_impl.2} parent=68 // pred_fallthru
          _
        // Predicated region
        $region86: #{_generator_forward_impl.2} parent=68 // pred_check
          %p438 = pneg %p152
        $region87: #{_generator_forward_impl.2} parent=68 // pred_check_branch
          %440 = sbr.rel (%p438) target = $region89
        $region88: #{_generator_forward_impl.2} parent=68 // pred_region
          _
        $region89: #{_generator_forward_impl.2} parent=68 // pred_fallthru
          _
      $region69: #{_generator_forward_impl.2} parent=5 // pred_fallthru
        _
      %p441 = scmp.le.s32.totalorder 2, %s11
      // Predicated region
      $region90: #{_generator_forward_impl.2} parent=5 // pred_check
        %p442 = pneg %p441
      $region91: #{_generator_forward_impl.2} parent=5 // pred_check_branch
        %444 = sbr.rel (%p442) target = $region93
      $region92: #{_generator_forward_impl.2} parent=5 // pred_region
        %s445 = ssub.s32 %s11, 2
        // Predicated region
        $region94: #{_generator_forward_impl.2} parent=92 // pred_check
          %p446 = pneg %p132
        $region95: #{_generator_forward_impl.2} parent=92 // pred_check_branch
          %448 = sbr.rel (%p446) target = $region97
        $region96: #{_generator_forward_impl.2} parent=92 // pred_region
          %p449 = scmp.lt.s32.totalorder %s22, 1
          %s450 = scalar_select %p449, %s22, 1
          %p451 = scmp.lt.s32.totalorder %s23, 1
          %s452 = scalar_select %p451, %s23, 1
          %s453 = smul.addr %s450, 2
          %s454 = sadd.s32 %s452, %s453
          %s455 = smul.addr %s454, 8
          %s456 = scalar_lea.vmem %s3, %s455
        $region97: #{_generator_forward_impl.2} parent=92 // pred_fallthru
          _
        // Predicated region
        $region98: #{_generator_forward_impl.2} parent=92 // pred_check
          %p457 = pneg %p158
        $region99: #{_generator_forward_impl.2} parent=92 // pred_check_branch
          %459 = sbr.rel (%p457) target = $region101
        $region100: #{_generator_forward_impl.2} parent=92 // pred_region
          %p460 = scmp.lt.s32.totalorder %s22, 1
          %s461 = scalar_select %p460, %s22, 1
          %s462 = smul.addr %s461, 8
          %s463 = scalar_lea.vmem %s4, %s462
        $region101: #{_generator_forward_impl.2} parent=92 // pred_fallthru
          _
      $region93: #{_generator_forward_impl.2} parent=5 // pred_fallthru
        _
    $region6: #{_generator_forward_impl.2} parent=1 // loop_footer
      %s15 = sadd.s32 1, %s11
    $region7: #{_generator_forward_impl.2} parent=1 // loop_footer_branch
      %10 = sbr.rel target = $region3
    $region8: #{_generator_forward_impl.2} parent=1 // loop_exit
      _

</llo_original>
